<compile_context>
chip_gen: v7x
topology: tpu7x:2x2x1
jax: 0.10.0
libtpu: 0.0.40
codegen_flags: <defaults>
</compile_context>

<pallas_src>
import functools

import jax
import jax.numpy as jnp
from jax.experimental import pallas as pl
from jax.experimental.pallas import tpu as pltpu


# Budget for the double-buffered gathered-feature input blocks.  Conservative
# enough for every generation (v7x: 64 MiB physical VMEM, 32 MiB default
# scoped; v5e: 16 MiB default scoped -> overridden by vmem_limit_bytes below).
_INPUT_VMEM_BUDGET_BYTES = 24 * 1024 * 1024
_VMEM_LIMIT_BYTES = 40 * 1024 * 1024


def _ir_consistency_kernel(feat_row_ref, feat_col_ref, out_ref, *, d_re):
    # Edge-major blocks: [TE, D_total], edges on the sublane axis, the full
    # concatenated feature dim on the lane axis.
    fr = feat_row_ref[...].astype(jnp.float32)       # [TE, D_total]
    fc = feat_col_ref[...].astype(jnp.float32)       # [TE, D_total]

    # Static column split of the concatenated table: [:d_re] = re_, rest = ir_h.
    re_r, ir_r = fr[:, :d_re], fr[:, d_re:]
    re_c, ir_c = fc[:, :d_re], fc[:, d_re:]

    # dis_agree_e = 1 - sigmoid(<re_[row], re_[col]>) == sigmoid(-dot)
    dot = jnp.sum(re_r * re_c, axis=1, keepdims=True)        # [TE, 1]
    dis_agree = jax.nn.sigmoid(-dot)                          # [TE, 1]

    # diff_e = || ir_h[row] - ir_h[col] ||^2
    d = ir_r - ir_c
    diff = jnp.sum(d * d, axis=1, keepdims=True)              # [TE, 1]

    s = jnp.sum(dis_agree * diff)                             # scalar tile partial

    # One lane-dense (1, 8, 128) output block per tile (unmasked stores);
    # wrapper reads partials[:, 0, 0].
    out_ref[...] = jnp.full(out_ref.shape, s, dtype=jnp.float32)


def _pick_edge_tile(requested, e, d_total, itemsize,
                    vmem_budget_bytes=_INPUT_VMEM_BUDGET_BYTES):
    """Largest sublane-aligned edge tile that (a) fits the double-buffered
    gathered-feature blocks in the VMEM budget and (b) leaves >= 2 grid tiles
    when there is enough work (so both v7x TensorCores are busy)."""
    per_edge_bytes = 2 * d_total * itemsize            # two gathered streams
    max_te_vmem = vmem_budget_bytes // max(1, 2 * per_edge_bytes)  # 2x buffers
    half = -(-max(e, 1) // 2)                          # ceil(E / 2)
    half = max(128, -(-half // 128) * 128)             # round up to 128
    te = min(int(requested), int(max_te_vmem), int(half))
    te = max(128, (te // 128) * 128)                   # multiple of 128
    return te


@functools.partial(jax.jit, static_argnames=("edge_tile",))
def ir_consistency_loss(re_, ir_h, edge_index, *, edge_tile=8192):
    """re_: [N, D_re], ir_h: [N, D_ir], edge_index: [2, E] int -> scalar f32."""
    row = edge_index[0].astype(jnp.int32)
    col = edge_index[1].astype(jnp.int32)
    E = row.shape[0]
    d_re = re_.shape[1]
    d_ir = ir_h.shape[1]
    d_total = d_re + d_ir

    if E == 0:
        # torch.mean of an empty tensor is NaN; keep the same semantics.
        return jnp.float32(jnp.nan)

    compute_dtype = jnp.promote_types(re_.dtype, ir_h.dtype)
    # One concatenated node table -> a single row-major gather per endpoint.
    feat = jnp.concatenate(
        [re_.astype(compute_dtype), ir_h.astype(compute_dtype)], axis=1)  # [N, D_total]

    te = _pick_edge_tile(edge_tile, E, d_total, jnp.dtype(compute_dtype).itemsize)
    num_tiles = pl.cdiv(E, te)
    e_pad = num_tiles * te
    pad = e_pad - E

    # Pad the cheap index vectors (not the gathered features).  Padded edges
    # have row == col == 0 -> diff_e == 0 -> zero contribution.
    row_p = jnp.pad(row, (0, pad))
    col_p = jnp.pad(col, (0, pad))

    # Contiguous-row gathers from the row-major table.
    feat_row = jnp.take(feat, row_p, axis=0)            # [E_pad, D_total]
    feat_col = jnp.take(feat, col_p, axis=0)            # [E_pad, D_total]

    spec = pl.BlockSpec((te, d_total), lambda i: (i, 0))
    kernel = functools.partial(_ir_consistency_kernel, d_re=d_re)

    partials = pl.pallas_call(
        kernel,
        out_shape=jax.ShapeDtypeStruct((num_tiles, 8, 128), jnp.float32),
        grid_spec=pltpu.PrefetchScalarGridSpec(
            num_scalar_prefetch=0,
            grid=(num_tiles,),
            in_specs=[spec, spec],
            out_specs=pl.BlockSpec((1, 8, 128), lambda i: (i, 0, 0)),
        ),
        compiler_params=pltpu.CompilerParams(
            dimension_semantics=("parallel",),
            vmem_limit_bytes=_VMEM_LIMIT_BYTES),
    )(feat_row, feat_col)

    total = jnp.sum(partials[:, 0, 0])
    return total / jnp.float32(E)


def _reference(re_, ir_h, edge_index):
    row, col = edge_index[0], edge_index[1]
    agree = jax.nn.sigmoid(jnp.sum(re_[row] * re_[col], axis=1))
    dis_agree = 1.0 - agree
    diff = jnp.sum((ir_h[row] - ir_h[col]) ** 2, axis=1)
    return jnp.mean(dis_agree * diff)


if __name__ == "__main__":
    key = jax.random.PRNGKey(0)
    k1, k2, k3, k4 = jax.random.split(key, 4)

    N = 16        # number of graph nodes
    D_RE = 32     # dim of re_ (label-agreement embedding)
    D_IR = 32     # dim of ir_h (irrelevant/consistency embedding)
    E = 20        # number of edges (not a tile multiple -> exercises padding)

    re_ = jax.random.normal(k1, (N, D_RE), dtype=jnp.float32)
    ir_h = jax.random.normal(k2, (N, D_IR), dtype=jnp.float32)
    row = jax.random.randint(k3, (E,), 0, N, dtype=jnp.int32)
    col = jax.random.randint(k4, (E,), 0, N, dtype=jnp.int32)
    edge_index = jnp.stack([row, col], axis=0)   # [2, E]

    loss = ir_consistency_loss(re_, ir_h, edge_index)
    loss = jax.block_until_ready(loss)

    ref = _reference(re_, ir_h, edge_index)
    assert jnp.allclose(loss, ref, rtol=1e-5, atol=1e-5), (loss, ref)

    print("KERNEL_OK")
</pallas_src>

<mosaic_0001>
module attributes {stable_mosaic.version = 11 : i64} {
  func.func @_ir_consistency_kernel(%arg0: i32, %arg1: memref<128x64xf32, #tpu.memory_space<vmem>>, %arg2: memref<128x64xf32, #tpu.memory_space<vmem>>, %arg3: memref<1x8x128xf32, #tpu.memory_space<vmem>>) attributes {dimension_semantics = [#tpu.dimension_semantics<parallel>], iteration_bounds = array<i64: 1>, scalar_prefetch = 0 : i64, scratch_operands = 0 : i64, tpu.core_type = #tpu.core_type<tc>, window_params = [{transform_indices = @transform_0, window_bounds = array<i64: 128, 64>}, {transform_indices = @transform_1, window_bounds = array<i64: 128, 64>}, {transform_indices = @transform_2, window_bounds = array<i64: 1, 8, 128>}]} {
    %c0 = arith.constant 0 : index
    %c0_0 = arith.constant 0 : index
    %0 = vector.load %arg1[%c0, %c0_0] : memref<128x64xf32, #tpu.memory_space<vmem>>, vector<128x64xf32>
    %c0_1 = arith.constant 0 : index
    %c0_2 = arith.constant 0 : index
    %1 = vector.load %arg2[%c0_1, %c0_2] : memref<128x64xf32, #tpu.memory_space<vmem>>, vector<128x64xf32>
    %2 = vector.extract_strided_slice %0 {offsets = [0, 0], sizes = [128, 32], strides = [1, 1]} : vector<128x64xf32> to vector<128x32xf32>
    %3 = vector.extract_strided_slice %0 {offsets = [0, 32], sizes = [128, 32], strides = [1, 1]} : vector<128x64xf32> to vector<128x32xf32>
    %4 = vector.extract_strided_slice %1 {offsets = [0, 0], sizes = [128, 32], strides = [1, 1]} : vector<128x64xf32> to vector<128x32xf32>
    %5 = vector.extract_strided_slice %1 {offsets = [0, 32], sizes = [128, 32], strides = [1, 1]} : vector<128x64xf32> to vector<128x32xf32>
    %6 = arith.mulf %2, %4 : vector<128x32xf32>
    %cst = arith.constant dense<0.000000e+00> : vector<128xf32>
    %7 = vector.multi_reduction <add>, %6, %cst [1] : vector<128x32xf32> to vector<128xf32>
    %8 = vector.shape_cast %7 : vector<128xf32> to vector<128x1xf32>
    %cst_3 = arith.constant 0.000000e+00 : f32
    %9 = vector.broadcast %cst_3 : f32 to vector<128x1xf32>
    %10 = arith.subf %9, %8 : vector<128x1xf32>
    %11 = arith.negf %10 : vector<128x1xf32>
    %12 = math.exp %11 : vector<128x1xf32>
    %cst_4 = arith.constant 1.000000e+00 : f32
    %13 = vector.broadcast %cst_4 : f32 to vector<128x1xf32>
    %14 = arith.addf %13, %12 : vector<128x1xf32>
    %15 = arith.divf %13, %14 : vector<128x1xf32>
    %16 = arith.subf %3, %5 : vector<128x32xf32>
    %17 = arith.mulf %16, %16 : vector<128x32xf32>
    %cst_5 = arith.constant dense<0.000000e+00> : vector<128xf32>
    %18 = vector.multi_reduction <add>, %17, %cst_5 [1] : vector<128x32xf32> to vector<128xf32>
    %19 = vector.shape_cast %18 : vector<128xf32> to vector<128x1xf32>
    %20 = arith.mulf %15, %19 : vector<128x1xf32>
    %21 = vector.shape_cast %20 : vector<128x1xf32> to vector<1x128x1xf32>
    %cst_6 = arith.constant dense<0.000000e+00> : vector<1xf32>
    %22 = vector.multi_reduction <add>, %21, %cst_6 [1, 2] : vector<1x128x1xf32> to vector<1xf32>
    %23 = vector.shape_cast %22 : vector<1xf32> to vector<1x1x1xf32>
    %24 = vector.extract %23[0, 0, 0] : f32 from vector<1x1x1xf32>
    %25 = vector.broadcast %24 : f32 to vector<1x8x128xf32>
    %c0_7 = arith.constant 0 : index
    %c0_8 = arith.constant 0 : index
    %c0_9 = arith.constant 0 : index
    %26 = vector.load %arg3[%c0_7, %c0_8, %c0_9] : memref<1x8x128xf32, #tpu.memory_space<vmem>>, vector<1x8x128xf32>
    tpu.vector_store %arg3[%c0_7, %c0_8, %c0_9], %25 {strides = array<i32>} : memref<1x8x128xf32, #tpu.memory_space<vmem>>, vector<1x8x128xf32>,
    return
  }
  func.func @transform_0(%arg0: i32) -> (i32, i32) {
    %c0_i32 = arith.constant 0 : i32
    %c0_i32_0 = arith.constant 0 : i32
    return %arg0, %c0_i32 : i32, i32
  }
  func.func @transform_1(%arg0: i32) -> (i32, i32) {
    %c0_i32 = arith.constant 0 : i32
    %c0_i32_0 = arith.constant 0 : i32
    return %arg0, %c0_i32 : i32, i32
  }
  func.func @transform_2(%arg0: i32) -> (i32, i32, i32) {
    %c0_i32 = arith.constant 0 : i32
    %c0_i32_0 = arith.constant 0 : i32
    %c0_i32_1 = arith.constant 0 : i32
    return %arg0, %c0_i32, %c0_i32_0 : i32, i32, i32
  }
}

</mosaic_0001>

<llo_original>
// kernel: ir_consistency_loss.1
$region0: #{ir_consistency_loss.1}
  #allocation0 [shape = 'u32[]', space=smem, size = 0x4, offset = 0x4, fixed_abs, tag = 'smem constant byte address 0x4 - core index']
  #allocation1 [shape = 'u32[144,128]{1,0:T(1,128)}', space=vmem, size = 0x12000, scoped, tag = 'internal scratch']
  %s0 = inlined_call_operand.vmem [shape: f32[128,64], index: 0, kind: input, shape index: {}]
  %s1 = inlined_call_operand.vmem [shape: f32[128,64], index: 1, kind: input, shape index: {}]
  %s2 = inlined_call_operand.vmem [shape: f32[1,8,128], index: 2, kind: output, shape index: {}]
  %s3 = sld [smem:[#allocation0]]
  $region18: #{ir_consistency_loss.1} parent=0
    _
  %s5 = ssub.s32 1, %s3
  %s6 = scalar_select 0, %s5, %s3
  // Predicated region
  $region2: #{ir_consistency_loss.1} parent=0 // pred_check
    _
  $region3: #{ir_consistency_loss.1} parent=0 // pred_check_branch
    %8 = sbr.rel (0) target = $region5
  $region4: #{ir_consistency_loss.1} parent=0 // pred_region
    _
  $region5: #{ir_consistency_loss.1} parent=0 // pred_fallthru
    _
  // Predicated region
  $region6: #{ir_consistency_loss.1} parent=0 // pred_check
    _
  $region7: #{ir_consistency_loss.1} parent=0 // pred_check_branch
    %10 = sbr.rel (0) target = $region9
  $region8: #{ir_consistency_loss.1} parent=0 // pred_region
    _
  $region9: #{ir_consistency_loss.1} parent=0 // pred_fallthru
    _
  %v11 = vld [vmem:[%s0] sm:$0xff]
  %v12 = vld [vmem:[%s0 + $0x8] sm:$0xff]
  %v13 = vld [vmem:[%s0 + $0x10] sm:$0xff]
  %v14 = vld [vmem:[%s0 + $0x18] sm:$0xff]
  %v15 = vld [vmem:[%s0 + $0x20] sm:$0xff]
  %v16 = vld [vmem:[%s0 + $0x28] sm:$0xff]
  %v17 = vld [vmem:[%s0 + $0x30] sm:$0xff]
  %v18 = vld [vmem:[%s0 + $0x38] sm:$0xff]
  %v19 = vld [vmem:[%s0 + $0x40] sm:$0xff]
  %v20 = vld [vmem:[%s0 + $0x48] sm:$0xff]
  %v21 = vld [vmem:[%s0 + $0x50] sm:$0xff]
  %v22 = vld [vmem:[%s0 + $0x58] sm:$0xff]
  %v23 = vld [vmem:[%s0 + $0x60] sm:$0xff]
  %v24 = vld [vmem:[%s0 + $0x68] sm:$0xff]
  %v25 = vld [vmem:[%s0 + $0x70] sm:$0xff]
  %v26 = vld [vmem:[%s0 + $0x78] sm:$0xff]
  %v27 = vld [vmem:[%s1] sm:$0xff]
  %v28 = vld [vmem:[%s1 + $0x8] sm:$0xff]
  %v29 = vld [vmem:[%s1 + $0x10] sm:$0xff]
  %v30 = vld [vmem:[%s1 + $0x18] sm:$0xff]
  %v31 = vld [vmem:[%s1 + $0x20] sm:$0xff]
  %v32 = vld [vmem:[%s1 + $0x28] sm:$0xff]
  %v33 = vld [vmem:[%s1 + $0x30] sm:$0xff]
  %v34 = vld [vmem:[%s1 + $0x38] sm:$0xff]
  %v35 = vld [vmem:[%s1 + $0x40] sm:$0xff]
  %v36 = vld [vmem:[%s1 + $0x48] sm:$0xff]
  %v37 = vld [vmem:[%s1 + $0x50] sm:$0xff]
  %v38 = vld [vmem:[%s1 + $0x58] sm:$0xff]
  %v39 = vld [vmem:[%s1 + $0x60] sm:$0xff]
  %v40 = vld [vmem:[%s1 + $0x68] sm:$0xff]
  %v41 = vld [vmem:[%s1 + $0x70] sm:$0xff]
  %v42 = vld [vmem:[%s1 + $0x78] sm:$0xff]
  %v43 = vmul.f32 %v11, %v27
  %v44 = vmul.f32 %v12, %v28
  %v45 = vmul.f32 %v13, %v29
  %v46 = vmul.f32 %v14, %v30
  %v47 = vmul.f32 %v15, %v31
  %v48 = vmul.f32 %v16, %v32
  %v49 = vmul.f32 %v17, %v33
  %v50 = vmul.f32 %v18, %v34
  %v51 = vmul.f32 %v19, %v35
  %v52 = vmul.f32 %v20, %v36
  %v53 = vmul.f32 %v21, %v37
  %v54 = vmul.f32 %v22, %v38
  %v55 = vmul.f32 %v23, %v39
  %v56 = vmul.f32 %v24, %v40
  %v57 = vmul.f32 %v25, %v41
  %v58 = vmul.f32 %v26, %v42
  %vm59 = vcmask 261120
  %v60 = vsel %vm59, %v43, 0.0
  %61 = vadd.xlane.f32.xlu0 %v60
  %v62 = vpop.xlane.xlu0 %61
  %v63 = vsel %vm59, %v44, 0.0
  %64 = vadd.xlane.f32.xlu0 %v63
  %v65 = vpop.xlane.xlu0 %64
  %v66 = vsel %vm59, %v45, 0.0
  %67 = vadd.xlane.f32.xlu0 %v66
  %v68 = vpop.xlane.xlu0 %67
  %v69 = vsel %vm59, %v46, 0.0
  %70 = vadd.xlane.f32.xlu0 %v69
  %v71 = vpop.xlane.xlu0 %70
  %v72 = vsel %vm59, %v47, 0.0
  %73 = vadd.xlane.f32.xlu0 %v72
  %v74 = vpop.xlane.xlu0 %73
  %v75 = vsel %vm59, %v48, 0.0
  %76 = vadd.xlane.f32.xlu0 %v75
  %v77 = vpop.xlane.xlu0 %76
  %v78 = vsel %vm59, %v49, 0.0
  %79 = vadd.xlane.f32.xlu0 %v78
  %v80 = vpop.xlane.xlu0 %79
  %v81 = vsel %vm59, %v50, 0.0
  %82 = vadd.xlane.f32.xlu0 %v81
  %v83 = vpop.xlane.xlu0 %82
  %v84 = vsel %vm59, %v51, 0.0
  %85 = vadd.xlane.f32.xlu0 %v84
  %v86 = vpop.xlane.xlu0 %85
  %v87 = vsel %vm59, %v52, 0.0
  %88 = vadd.xlane.f32.xlu0 %v87
  %v89 = vpop.xlane.xlu0 %88
  %v90 = vsel %vm59, %v53, 0.0
  %91 = vadd.xlane.f32.xlu0 %v90
  %v92 = vpop.xlane.xlu0 %91
  %v93 = vsel %vm59, %v54, 0.0
  %94 = vadd.xlane.f32.xlu0 %v93
  %v95 = vpop.xlane.xlu0 %94
  %v96 = vsel %vm59, %v55, 0.0
  %97 = vadd.xlane.f32.xlu0 %v96
  %v98 = vpop.xlane.xlu0 %97
  %v99 = vsel %vm59, %v56, 0.0
  %100 = vadd.xlane.f32.xlu0 %v99
  %v101 = vpop.xlane.xlu0 %100
  %v102 = vsel %vm59, %v57, 0.0
  %103 = vadd.xlane.f32.xlu0 %v102
  %v104 = vpop.xlane.xlu0 %103
  %v105 = vsel %vm59, %v58, 0.0
  %106 = vadd.xlane.f32.xlu0 %v105
  %v107 = vpop.xlane.xlu0 %106
  %v108 = vsub.f32 0.0, %v62
  %v109 = vsub.f32 0.0, %v65
  %v110 = vsub.f32 0.0, %v68
  %v111 = vsub.f32 0.0, %v71
  %v112 = vsub.f32 0.0, %v74
  %v113 = vsub.f32 0.0, %v77
  %v114 = vsub.f32 0.0, %v80
  %v115 = vsub.f32 0.0, %v83
  %v116 = vsub.f32 0.0, %v86
  %v117 = vsub.f32 0.0, %v89
  %v118 = vsub.f32 0.0, %v92
  %v119 = vsub.f32 0.0, %v95
  %v120 = vsub.f32 0.0, %v98
  %v121 = vsub.f32 0.0, %v101
  %v122 = vsub.f32 0.0, %v104
  %v123 = vsub.f32 0.0, %v107
  %v124 = vxor.u32 %v108, 2147483648
  %v125 = vxor.u32 %v109, 2147483648
  %v126 = vxor.u32 %v110, 2147483648
  %v127 = vxor.u32 %v111, 2147483648
  %v128 = vxor.u32 %v112, 2147483648
  %v129 = vxor.u32 %v113, 2147483648
  %v130 = vxor.u32 %v114, 2147483648
  %v131 = vxor.u32 %v115, 2147483648
  %v132 = vxor.u32 %v116, 2147483648
  %v133 = vxor.u32 %v117, 2147483648
  %v134 = vxor.u32 %v118, 2147483648
  %v135 = vxor.u32 %v119, 2147483648
  %v136 = vxor.u32 %v120, 2147483648
  %v137 = vxor.u32 %v121, 2147483648
  %v138 = vxor.u32 %v122, 2147483648
  %v139 = vxor.u32 %v123, 2147483648
  %v140 = vmul.f32 %v124, 1.442695
  %v141 = vpow.pop %v140
  %v142 = vmul.f32 %v125, 1.442695
  %v143 = vpow.pop %v142
  %v144 = vmul.f32 %v126, 1.442695
  %v145 = vpow.pop %v144
  %v146 = vmul.f32 %v127, 1.442695
  %v147 = vpow.pop %v146
  %v148 = vmul.f32 %v128, 1.442695
  %v149 = vpow.pop %v148
  %v150 = vmul.f32 %v129, 1.442695
  %v151 = vpow.pop %v150
  %v152 = vmul.f32 %v130, 1.442695
  %v153 = vpow.pop %v152
  %v154 = vmul.f32 %v131, 1.442695
  %v155 = vpow.pop %v154
  %v156 = vmul.f32 %v132, 1.442695
  %v157 = vpow.pop %v156
  %v158 = vmul.f32 %v133, 1.442695
  %v159 = vpow.pop %v158
  %v160 = vmul.f32 %v134, 1.442695
  %v161 = vpow.pop %v160
  %v162 = vmul.f32 %v135, 1.442695
  %v163 = vpow.pop %v162
  %v164 = vmul.f32 %v136, 1.442695
  %v165 = vpow.pop %v164
  %v166 = vmul.f32 %v137, 1.442695
  %v167 = vpow.pop %v166
  %v168 = vmul.f32 %v138, 1.442695
  %v169 = vpow.pop %v168
  %v170 = vmul.f32 %v139, 1.442695
  %v171 = vpow.pop %v170
  %v172 = vadd.f32 %v141, 1.0
  %v173 = vadd.f32 %v143, 1.0
  %v174 = vadd.f32 %v145, 1.0
  %v175 = vadd.f32 %v147, 1.0
  %v176 = vadd.f32 %v149, 1.0
  %v177 = vadd.f32 %v151, 1.0
  %v178 = vadd.f32 %v153, 1.0
  %v179 = vadd.f32 %v155, 1.0
  %v180 = vadd.f32 %v157, 1.0
  %v181 = vadd.f32 %v159, 1.0
  %v182 = vadd.f32 %v161, 1.0
  %v183 = vadd.f32 %v163, 1.0
  %v184 = vadd.f32 %v165, 1.0
  %v185 = vadd.f32 %v167, 1.0
  %v186 = vadd.f32 %v169, 1.0
  %v187 = vadd.f32 %v171, 1.0
  %v188 = vrcp.pop %v172
  %v189 = vmul.f32 1.0, %v188
  %v190 = vrcp.pop %v173
  %v191 = vmul.f32 1.0, %v190
  %v192 = vrcp.pop %v174
  %v193 = vmul.f32 1.0, %v192
  %v194 = vrcp.pop %v175
  %v195 = vmul.f32 1.0, %v194
  %v196 = vrcp.pop %v176
  %v197 = vmul.f32 1.0, %v196
  %v198 = vrcp.pop %v177
  %v199 = vmul.f32 1.0, %v198
  %v200 = vrcp.pop %v178
  %v201 = vmul.f32 1.0, %v200
  %v202 = vrcp.pop %v179
  %v203 = vmul.f32 1.0, %v202
  %v204 = vrcp.pop %v180
  %v205 = vmul.f32 1.0, %v204
  %v206 = vrcp.pop %v181
  %v207 = vmul.f32 1.0, %v206
  %v208 = vrcp.pop %v182
  %v209 = vmul.f32 1.0, %v208
  %v210 = vrcp.pop %v183
  %v211 = vmul.f32 1.0, %v210
  %v212 = vrcp.pop %v184
  %v213 = vmul.f32 1.0, %v212
  %v214 = vrcp.pop %v185
  %v215 = vmul.f32 1.0, %v214
  %v216 = vrcp.pop %v186
  %v217 = vmul.f32 1.0, %v216
  %v218 = vrcp.pop %v187
  %v219 = vmul.f32 1.0, %v218
  %v220 = vsub.f32 %v11, %v27
  %v221 = vsub.f32 %v12, %v28
  %v222 = vsub.f32 %v13, %v29
  %v223 = vsub.f32 %v14, %v30
  %v224 = vsub.f32 %v15, %v31
  %v225 = vsub.f32 %v16, %v32
  %v226 = vsub.f32 %v17, %v33
  %v227 = vsub.f32 %v18, %v34
  %v228 = vsub.f32 %v19, %v35
  %v229 = vsub.f32 %v20, %v36
  %v230 = vsub.f32 %v21, %v37
  %v231 = vsub.f32 %v22, %v38
  %v232 = vsub.f32 %v23, %v39
  %v233 = vsub.f32 %v24, %v40
  %v234 = vsub.f32 %v25, %v41
  %v235 = vsub.f32 %v26, %v42
  %v236 = vmul.f32 %v220, %v220
  %v237 = vmul.f32 %v221, %v221
  %v238 = vmul.f32 %v222, %v222
  %v239 = vmul.f32 %v223, %v223
  %v240 = vmul.f32 %v224, %v224
  %v241 = vmul.f32 %v225, %v225
  %v242 = vmul.f32 %v226, %v226
  %v243 = vmul.f32 %v227, %v227
  %v244 = vmul.f32 %v228, %v228
  %v245 = vmul.f32 %v229, %v229
  %v246 = vmul.f32 %v230, %v230
  %v247 = vmul.f32 %v231, %v231
  %v248 = vmul.f32 %v232, %v232
  %v249 = vmul.f32 %v233, %v233
  %v250 = vmul.f32 %v234, %v234
  %v251 = vmul.f32 %v235, %v235
  %268 = vrot.lane.b32.xlu0 %v236, 96
  %v269 = vpop.permute.xlu0 %268
  %270 = vrot.lane.b32.xlu0 %v237, 96
  %v271 = vpop.permute.xlu0 %270
  %272 = vrot.lane.b32.xlu0 %v238, 96
  %v273 = vpop.permute.xlu0 %272
  %274 = vrot.lane.b32.xlu0 %v239, 96
  %v275 = vpop.permute.xlu0 %274
  %276 = vrot.lane.b32.xlu0 %v240, 96
  %v277 = vpop.permute.xlu0 %276
  %278 = vrot.lane.b32.xlu0 %v241, 96
  %v279 = vpop.permute.xlu0 %278
  %280 = vrot.lane.b32.xlu0 %v242, 96
  %v281 = vpop.permute.xlu0 %280
  %282 = vrot.lane.b32.xlu0 %v243, 96
  %v283 = vpop.permute.xlu0 %282
  %284 = vrot.lane.b32.xlu0 %v244, 96
  %v285 = vpop.permute.xlu0 %284
  %286 = vrot.lane.b32.xlu0 %v245, 96
  %v287 = vpop.permute.xlu0 %286
  %288 = vrot.lane.b32.xlu0 %v246, 96
  %v289 = vpop.permute.xlu0 %288
  %290 = vrot.lane.b32.xlu0 %v247, 96
  %v291 = vpop.permute.xlu0 %290
  %292 = vrot.lane.b32.xlu0 %v248, 96
  %v293 = vpop.permute.xlu0 %292
  %294 = vrot.lane.b32.xlu0 %v249, 96
  %v295 = vpop.permute.xlu0 %294
  %296 = vrot.lane.b32.xlu0 %v250, 96
  %v297 = vpop.permute.xlu0 %296
  %298 = vrot.lane.b32.xlu0 %v251, 96
  %v299 = vpop.permute.xlu0 %298
  %v316 = vsel %vm59, %v269, 0.0
  %317 = vadd.xlane.f32.xlu0 %v316
  %v318 = vpop.xlane.xlu0 %317
  %v319 = vsel %vm59, %v271, 0.0
  %320 = vadd.xlane.f32.xlu0 %v319
  %v321 = vpop.xlane.xlu0 %320
  %v322 = vsel %vm59, %v273, 0.0
  %323 = vadd.xlane.f32.xlu0 %v322
  %v324 = vpop.xlane.xlu0 %323
  %v325 = vsel %vm59, %v275, 0.0
  %326 = vadd.xlane.f32.xlu0 %v325
  %v327 = vpop.xlane.xlu0 %326
  %v328 = vsel %vm59, %v277, 0.0
  %329 = vadd.xlane.f32.xlu0 %v328
  %v330 = vpop.xlane.xlu0 %329
  %v331 = vsel %vm59, %v279, 0.0
  %332 = vadd.xlane.f32.xlu0 %v331
  %v333 = vpop.xlane.xlu0 %332
  %v334 = vsel %vm59, %v281, 0.0
  %335 = vadd.xlane.f32.xlu0 %v334
  %v336 = vpop.xlane.xlu0 %335
  %v337 = vsel %vm59, %v283, 0.0
  %338 = vadd.xlane.f32.xlu0 %v337
  %v339 = vpop.xlane.xlu0 %338
  %v340 = vsel %vm59, %v285, 0.0
  %341 = vadd.xlane.f32.xlu0 %v340
  %v342 = vpop.xlane.xlu0 %341
  %v343 = vsel %vm59, %v287, 0.0
  %344 = vadd.xlane.f32.xlu0 %v343
  %v345 = vpop.xlane.xlu0 %344
  %v346 = vsel %vm59, %v289, 0.0
  %347 = vadd.xlane.f32.xlu0 %v346
  %v348 = vpop.xlane.xlu0 %347
  %v349 = vsel %vm59, %v291, 0.0
  %350 = vadd.xlane.f32.xlu0 %v349
  %v351 = vpop.xlane.xlu0 %350
  %v352 = vsel %vm59, %v293, 0.0
  %353 = vadd.xlane.f32.xlu0 %v352
  %v354 = vpop.xlane.xlu0 %353
  %v355 = vsel %vm59, %v295, 0.0
  %356 = vadd.xlane.f32.xlu0 %v355
  %v357 = vpop.xlane.xlu0 %356
  %v358 = vsel %vm59, %v297, 0.0
  %359 = vadd.xlane.f32.xlu0 %v358
  %v360 = vpop.xlane.xlu0 %359
  %v361 = vsel %vm59, %v299, 0.0
  %362 = vadd.xlane.f32.xlu0 %v361
  %v363 = vpop.xlane.xlu0 %362
  %v364 = vmul.f32 %v189, %v318
  %v365 = vmul.f32 %v191, %v321
  %v366 = vmul.f32 %v193, %v324
  %v367 = vmul.f32 %v195, %v327
  %v368 = vmul.f32 %v197, %v330
  %v369 = vmul.f32 %v199, %v333
  %v370 = vmul.f32 %v201, %v336
  %v371 = vmul.f32 %v203, %v339
  %v372 = vmul.f32 %v205, %v342
  %v373 = vmul.f32 %v207, %v345
  %v374 = vmul.f32 %v209, %v348
  %v375 = vmul.f32 %v211, %v351
  %v376 = vmul.f32 %v213, %v354
  %v377 = vmul.f32 %v215, %v357
  %v378 = vmul.f32 %v217, %v360
  %v379 = vmul.f32 %v219, %v363
  %vm380 = vcmask 7168
  %v381 = vsel %vm380, %v364, 0.0
  %v382 = vsel %vm380, %v365, 0.0
  %v383 = vadd.f32 %v381, %v382
  %v384 = vsel %vm380, %v366, 0.0
  %v385 = vadd.f32 %v383, %v384
  %v386 = vsel %vm380, %v367, 0.0
  %v387 = vadd.f32 %v385, %v386
  %v388 = vsel %vm380, %v368, 0.0
  %v389 = vadd.f32 %v387, %v388
  %v390 = vsel %vm380, %v369, 0.0
  %v391 = vadd.f32 %v389, %v390
  %v392 = vsel %vm380, %v370, 0.0
  %v393 = vadd.f32 %v391, %v392
  %v394 = vsel %vm380, %v371, 0.0
  %v395 = vadd.f32 %v393, %v394
  %v396 = vsel %vm380, %v372, 0.0
  %v397 = vadd.f32 %v395, %v396
  %v398 = vsel %vm380, %v373, 0.0
  %v399 = vadd.f32 %v397, %v398
  %v400 = vsel %vm380, %v374, 0.0
  %v401 = vadd.f32 %v399, %v400
  %v402 = vsel %vm380, %v375, 0.0
  %v403 = vadd.f32 %v401, %v402
  %v404 = vsel %vm380, %v376, 0.0
  %v405 = vadd.f32 %v403, %v404
  %v406 = vsel %vm380, %v377, 0.0
  %v407 = vadd.f32 %v405, %v406
  %v408 = vsel %vm380, %v378, 0.0
  %v409 = vadd.f32 %v407, %v408
  %v410 = vsel %vm380, %v379, 0.0
  %v411 = vadd.f32 %v409, %v410
  %412 = vadd.xlane.f32.xlu0 %v411
  %v413 = vpop.xlane.xlu0 %412
  %v414 = vrot.slane %v413, 4
  %v415 = vadd.f32 %v413, %v414
  %v416 = vrot.slane %v415, 2
  %v417 = vadd.f32 %v415, %v416
  %v418 = vrot.slane %v417, 1
  %v419 = vadd.f32 %v417, %v418
  %s420 = vtos %v419
  %v421 = vstv %s420
  %422 = vst [vmem:[%s2] sm:$0xff] %v421
  // Predicated region
  $region10: #{ir_consistency_loss.1} parent=0 // pred_check
    _
  $region11: #{ir_consistency_loss.1} parent=0 // pred_check_branch
    %424 = sbr.rel (0) target = $region13
  $region12: #{ir_consistency_loss.1} parent=0 // pred_region
    _
  $region13: #{ir_consistency_loss.1} parent=0 // pred_fallthru
    _
  // Predicated region
  $region14: #{ir_consistency_loss.1} parent=0 // pred_check
    _
  $region15: #{ir_consistency_loss.1} parent=0 // pred_check_branch
    %426 = sbr.rel (0) target = $region17
  $region16: #{ir_consistency_loss.1} parent=0 // pred_region
    _
  $region17: #{ir_consistency_loss.1} parent=0 // pred_fallthru
    _

</llo_original>
